<compile_context>
chip_gen: v5e
topology: v5e:2x2
jax: 0.10.0
libtpu: 0.0.40
codegen_flags: <defaults>
</compile_context>

<pallas_src>
import functools

import jax
import jax.numpy as jnp
from jax.experimental import pallas as pl
from jax.experimental.pallas import tpu as pltpu


IN_FEATURES = 20
HIDDEN_FEATURES = 256
OUT_FEATURES = 10

# Cap on the batch tile: footprint ~ tb * (x f32*2buf + out f32*2buf + h f32 +
# h bf16) ~= tb * 1.8 KB  -> ~7.3 MiB at tb=4096, inside v5e's 16 MiB scoped
# VMEM default (v6e/v7x have 32 MiB scoped).
MAX_TB = 4096


def _round_up(n, m):
    return (n + m - 1) // m * m


def mlp_kernel(x_ref, w1_ref, b1_ref, w2_ref, b2_ref, o_ref):
    # x arrives as f32 (no separate wrapper cast pass); cast to bf16 for the
    # MXU, accumulate in f32.
    x = x_ref[...].astype(jnp.bfloat16)
    # hidden = relu(x @ W1 + b1): bias + ReLU in f32 on the VPU.
    h = jnp.dot(x, w1_ref[...], preferred_element_type=jnp.float32)
    h = jnp.maximum(h + b1_ref[...], 0.0)
    # out = hidden @ W2 + b2, written at the logical 10-column width
    # (masked vst.msk stores; the store slot has huge slack here).
    o = jnp.dot(h.astype(w2_ref.dtype), w2_ref[...],
                preferred_element_type=jnp.float32)
    o_ref[...] = (o + b2_ref[...]).astype(o_ref.dtype)


def _choose_tile(batch, block_b):
    """Batch tile (multiple of 16, <= MAX_TB) giving an even number of grid
    steps (>=2 when the batch allows it) so v7x's two TensorCores both work."""
    b16 = _round_up(batch, 16)
    steps = pl.cdiv(b16, min(block_b, MAX_TB))
    if b16 > 16:
        steps = max(steps, 2)          # at least 2 steps -> megacore sharding
        steps = _round_up(steps, 2)    # even count -> balanced 2-core split
    tb = _round_up(pl.cdiv(b16, steps), 16)
    b_pad = _round_up(batch, tb)
    return tb, b_pad


@functools.partial(jax.jit, static_argnames=("block_b",))
def mlp_forward(x, w1, b1, w2, b2, *, block_b=2048):
    """x: (B, 20) f32; w1: (20, 256); b1: (256,); w2: (256, 10); b2: (10,)."""
    B = x.shape[0]
    tb, b_pad = _choose_tile(B, block_b)

    # Pad the batch only when needed (padded rows are sliced off at the end).
    if b_pad == B:
        x_p = x.astype(jnp.float32)
    else:
        x_p = jnp.zeros((b_pad, IN_FEATURES), jnp.float32).at[:B].set(
            x.astype(jnp.float32))

    # Weights to bf16 (one-time, tiny); biases as (1, N) f32 rows.
    w1_b = w1.astype(jnp.bfloat16)
    w2_b = w2.astype(jnp.bfloat16)
    b1_2d = b1.reshape(1, -1).astype(jnp.float32)
    b2_2d = b2.reshape(1, -1).astype(jnp.float32)

    grid = (b_pad // tb,)

    cost = pl.CostEstimate(
        flops=2 * b_pad * (IN_FEATURES * HIDDEN_FEATURES
                           + HIDDEN_FEATURES * OUT_FEATURES),
        transcendentals=0,
        bytes_accessed=(b_pad * IN_FEATURES * 4           # x (f32 in)
                        + IN_FEATURES * HIDDEN_FEATURES * 2
                        + HIDDEN_FEATURES * 4
                        + HIDDEN_FEATURES * OUT_FEATURES * 2
                        + OUT_FEATURES * 4
                        + b_pad * OUT_FEATURES * 4),      # out (f32, narrow)
    )

    out = pl.pallas_call(
        mlp_kernel,
        out_shape=jax.ShapeDtypeStruct((b_pad, OUT_FEATURES), jnp.float32),
        grid_spec=pltpu.PrefetchScalarGridSpec(
            num_scalar_prefetch=0,
            grid=grid,
            in_specs=[
                # Batch-tiled input: one (tb, 20) f32 tile per grid step,
                # double-buffered by the Pallas pipeline.
                pl.BlockSpec((tb, IN_FEATURES), lambda i: (i, 0)),
                # Weights / biases: constant index_map -> VMEM-resident across
                # the whole grid (no per-step DMA traffic).  ~65 KB total, so
                # the redundant second pipeline buffer is negligible.
                pl.BlockSpec((IN_FEATURES, HIDDEN_FEATURES), lambda i: (0, 0)),
                pl.BlockSpec((1, HIDDEN_FEATURES), lambda i: (0, 0)),
                pl.BlockSpec((HIDDEN_FEATURES, OUT_FEATURES), lambda i: (0, 0)),
                pl.BlockSpec((1, OUT_FEATURES), lambda i: (0, 0)),
            ],
            # Logical-width output block: (tb, 10) is legal since 10 equals
            # the full array's last dim -> no padded slab, no extra slice pass.
            out_specs=pl.BlockSpec((tb, OUT_FEATURES), lambda i: (i, 0)),
        ),
        compiler_params=pltpu.CompilerParams(
            # Batch tiles are independent -> shard across TCs on megacore/v7x.
            dimension_semantics=("parallel",),
        ),
        cost_estimate=cost,
    )(x_p, w1_b, b1_2d, w2_b, b2_2d)

    return out if b_pad == B else out[:B]


def init_params(key, in_features=IN_FEATURES, hidden_features=HIDDEN_FEATURES,
                out_features=OUT_FEATURES):
    """Deterministic init mimicking nn.Linear defaults U(-1/sqrt(fan_in), ...).

    Weights are stored pre-transposed to (in, out) so the kernel computes
    y = x @ W + b directly on the MXU.
    """
    k1, k2, k3, k4 = jax.random.split(key, 4)
    bound1 = 1.0 / (in_features ** 0.5)
    bound2 = 1.0 / (hidden_features ** 0.5)
    w1 = jax.random.uniform(k1, (in_features, hidden_features),
                            minval=-bound1, maxval=bound1, dtype=jnp.float32)
    b1 = jax.random.uniform(k2, (hidden_features,),
                            minval=-bound1, maxval=bound1, dtype=jnp.float32)
    w2 = jax.random.uniform(k3, (hidden_features, out_features),
                            minval=-bound2, maxval=bound2, dtype=jnp.float32)
    b2 = jax.random.uniform(k4, (out_features,),
                            minval=-bound2, maxval=bound2, dtype=jnp.float32)
    return w1, b1, w2, b2


if __name__ == "__main__":
    key = jax.random.PRNGKey(0)
    kx, kp = jax.random.split(key)

    batch = 2
    x = jax.random.normal(kx, (batch, IN_FEATURES), dtype=jnp.float32)
    w1, b1, w2, b2 = init_params(kp)

    out = mlp_forward(x, w1, b1, w2, b2)
    out = jax.block_until_ready(out)

    # Full-precision reference for the original module's semantics.  The kernel
    # uses bf16 MXU operands with f32 accumulation, so allow bf16-level error.
    ref = jnp.maximum(x @ w1 + b1, 0.0) @ w2 + b2
    assert out.shape == (batch, OUT_FEATURES), out.shape
    max_err = float(jnp.max(jnp.abs(out - ref)))
    assert jnp.allclose(out, ref, atol=2e-2, rtol=2e-2), (
        f"mismatch vs reference: max abs err = {max_err}")

    print("KERNEL_OK")
</pallas_src>

<mosaic_0001>
module attributes {stable_mosaic.version = 11 : i64} {
  func.func @mlp_kernel(%arg0: i32, %arg1: memref<16x20xf32, #tpu.memory_space<vmem>>, %arg2: memref<20x256xbf16, #tpu.memory_space<vmem>>, %arg3: memref<1x256xf32, #tpu.memory_space<vmem>>, %arg4: memref<256x10xbf16, #tpu.memory_space<vmem>>, %arg5: memref<1x10xf32, #tpu.memory_space<vmem>>, %arg6: memref<16x10xf32, #tpu.memory_space<vmem>>) attributes {dimension_semantics = [#tpu.dimension_semantics<parallel>], iteration_bounds = array<i64: 1>, scalar_prefetch = 0 : i64, scratch_operands = 0 : i64, tpu.core_type = #tpu.core_type<tc>, window_params = [{transform_indices = @transform_0, window_bounds = array<i64: 16, 20>}, {pipeline_mode = #tpu.pipeline_mode<synchronous>, transform_indices = @transform_1, window_bounds = array<i64: 20, 256>}, {pipeline_mode = #tpu.pipeline_mode<synchronous>, transform_indices = @transform_2, window_bounds = array<i64: 1, 256>}, {pipeline_mode = #tpu.pipeline_mode<synchronous>, transform_indices = @transform_3, window_bounds = array<i64: 256, 10>}, {pipeline_mode = #tpu.pipeline_mode<synchronous>, transform_indices = @transform_4, window_bounds = array<i64: 1, 10>}, {transform_indices = @transform_5, window_bounds = array<i64: 16, 10>}]} {
    %c0 = arith.constant 0 : index
    %c0_0 = arith.constant 0 : index
    %0 = vector.load %arg1[%c0, %c0_0] : memref<16x20xf32, #tpu.memory_space<vmem>>, vector<16x20xf32>
    %1 = arith.truncf %0 : vector<16x20xf32> to vector<16x20xbf16>
    %c0_1 = arith.constant 0 : index
    %c0_2 = arith.constant 0 : index
    %2 = vector.load %arg2[%c0_1, %c0_2] : memref<20x256xbf16, #tpu.memory_space<vmem>>, vector<20x256xbf16>
    %cst = arith.constant dense<0.000000e+00> : vector<16x256xf32>
    %3 = tpu.matmul %1, %2, %cst {dimension_numbers = #tpu.dot_dimension_numbers<[1], [0], [0], [1], [0, 0, 1, 1], [], []>} : vector<16x20xbf16>, vector<20x256xbf16>, vector<16x256xf32> -> vector<16x256xf32>
    %c0_3 = arith.constant 0 : index
    %c0_4 = arith.constant 0 : index
    %4 = vector.load %arg3[%c0_3, %c0_4] : memref<1x256xf32, #tpu.memory_space<vmem>>, vector<1x256xf32>
    %5 = vector.broadcast %4 : vector<1x256xf32> to vector<16x256xf32>
    %6 = arith.addf %3, %5 : vector<16x256xf32>
    %cst_5 = arith.constant 0.000000e+00 : f32
    %7 = vector.broadcast %cst_5 : f32 to vector<16x256xf32>
    %8 = arith.maximumf %6, %7 : vector<16x256xf32>
    %9 = arith.truncf %8 : vector<16x256xf32> to vector<16x256xbf16>
    %c0_6 = arith.constant 0 : index
    %c0_7 = arith.constant 0 : index
    %10 = vector.load %arg4[%c0_6, %c0_7] : memref<256x10xbf16, #tpu.memory_space<vmem>>, vector<256x10xbf16>
    %cst_8 = arith.constant dense<0.000000e+00> : vector<16x10xf32>
    %11 = tpu.matmul %9, %10, %cst_8 {dimension_numbers = #tpu.dot_dimension_numbers<[1], [0], [0], [1], [0, 0, 1, 1], [], []>} : vector<16x256xbf16>, vector<256x10xbf16>, vector<16x10xf32> -> vector<16x10xf32>
    %c0_9 = arith.constant 0 : index
    %c0_10 = arith.constant 0 : index
    %12 = vector.load %arg5[%c0_9, %c0_10] : memref<1x10xf32, #tpu.memory_space<vmem>>, vector<1x10xf32>
    %13 = vector.broadcast %12 : vector<1x10xf32> to vector<16x10xf32>
    %14 = arith.addf %11, %13 : vector<16x10xf32>
    %c0_11 = arith.constant 0 : index
    %c0_12 = arith.constant 0 : index
    %15 = vector.load %arg6[%c0_11, %c0_12] : memref<16x10xf32, #tpu.memory_space<vmem>>, vector<16x10xf32>
    tpu.vector_store %arg6[%c0_11, %c0_12], %14 {strides = array<i32>} : memref<16x10xf32, #tpu.memory_space<vmem>>, vector<16x10xf32>,
    return
  }
  func.func @transform_0(%arg0: i32) -> (i32, i32) {
    %c0_i32 = arith.constant 0 : i32
    %c0_i32_0 = arith.constant 0 : i32
    return %arg0, %c0_i32 : i32, i32
  }
  func.func @transform_1(%arg0: i32) -> (i32, i32) {
    %c0_i32 = arith.constant 0 : i32
    %c0_i32_0 = arith.constant 0 : i32
    %c0_i32_1 = arith.constant 0 : i32
    return %c0_i32, %c0_i32_0 : i32, i32
  }
  func.func @transform_2(%arg0: i32) -> (i32, i32) {
    %c0_i32 = arith.constant 0 : i32
    %c0_i32_0 = arith.constant 0 : i32
    %c0_i32_1 = arith.constant 0 : i32
    return %c0_i32, %c0_i32_0 : i32, i32
  }
  func.func @transform_3(%arg0: i32) -> (i32, i32) {
    %c0_i32 = arith.constant 0 : i32
    %c0_i32_0 = arith.constant 0 : i32
    %c0_i32_1 = arith.constant 0 : i32
    return %c0_i32, %c0_i32_0 : i32, i32
  }
  func.func @transform_4(%arg0: i32) -> (i32, i32) {
    %c0_i32 = arith.constant 0 : i32
    %c0_i32_0 = arith.constant 0 : i32
    %c0_i32_1 = arith.constant 0 : i32
    return %c0_i32, %c0_i32_0 : i32, i32
  }
  func.func @transform_5(%arg0: i32) -> (i32, i32) {
    %c0_i32 = arith.constant 0 : i32
    %c0_i32_0 = arith.constant 0 : i32
    return %arg0, %c0_i32 : i32, i32
  }
}

</mosaic_0001>

<llo_original>
// kernel: mlp_forward.1
$region0: #{mlp_forward.1}
  #allocation0 [shape = 'u32[]', space=smem, size = 0x4, offset = 0x4, fixed_abs, tag = 'smem constant byte address 0x4 - core index']
  #allocation1 [shape = 'u32[72,128]{1,0:T(1,128)}', space=vmem, size = 0x9000, scoped, tag = 'internal scratch']
  %s0 = inlined_call_operand.vmem [shape: f32[16,20], index: 0, kind: input, shape index: {}]
  %s1 = inlined_call_operand.vmem [shape: bf16[20,256], index: 1, kind: input, shape index: {}]
  %s2 = inlined_call_operand.vmem [shape: f32[1,256], index: 2, kind: input, shape index: {}]
  %s3 = inlined_call_operand.vmem [shape: bf16[256,10], index: 3, kind: input, shape index: {}]
  %s4 = inlined_call_operand.vmem [shape: f32[1,10], index: 4, kind: input, shape index: {}]
  %s5 = inlined_call_operand.vmem [shape: f32[16,10], index: 5, kind: output, shape index: {}]
  %s6 = sld [smem:[#allocation0]]
  $region30: #{mlp_forward.1} parent=0
    _
  %s8 = ssub.s32 1, %s6
  %s9 = scalar_select 0, %s8, %s6
  // Predicated region
  $region2: #{mlp_forward.1} parent=0 // pred_check
    _
  $region3: #{mlp_forward.1} parent=0 // pred_check_branch
    %11 = sbr.rel (0) target = $region5
  $region4: #{mlp_forward.1} parent=0 // pred_region
    _
  $region5: #{mlp_forward.1} parent=0 // pred_fallthru
    _
  // Predicated region
  $region6: #{mlp_forward.1} parent=0 // pred_check
    _
  $region7: #{mlp_forward.1} parent=0 // pred_check_branch
    %13 = sbr.rel (0) target = $region9
  $region8: #{mlp_forward.1} parent=0 // pred_region
    _
  $region9: #{mlp_forward.1} parent=0 // pred_fallthru
    _
  // Predicated region
  $region10: #{mlp_forward.1} parent=0 // pred_check
    _
  $region11: #{mlp_forward.1} parent=0 // pred_check_branch
    %15 = sbr.rel (0) target = $region13
  $region12: #{mlp_forward.1} parent=0 // pred_region
    _
  $region13: #{mlp_forward.1} parent=0 // pred_fallthru
    _
  // Predicated region
  $region14: #{mlp_forward.1} parent=0 // pred_check
    _
  $region15: #{mlp_forward.1} parent=0 // pred_check_branch
    %17 = sbr.rel (0) target = $region17
  $region16: #{mlp_forward.1} parent=0 // pred_region
    _
  $region17: #{mlp_forward.1} parent=0 // pred_fallthru
    _
  // Predicated region
  $region18: #{mlp_forward.1} parent=0 // pred_check
    _
  $region19: #{mlp_forward.1} parent=0 // pred_check_branch
    %19 = sbr.rel (0) target = $region21
  $region20: #{mlp_forward.1} parent=0 // pred_region
    _
  $region21: #{mlp_forward.1} parent=0 // pred_fallthru
    _
  %v21 = vld [vmem:[%s0] sm:$0xff]
  %v22 = vld [vmem:[%s0 + $0x8] sm:$0xff]
  %v23 = vpack.c.bf16 %v22, %v21
  %v24 = vld [vmem:[%s1] sm:$0xff]
  %v25 = vld [vmem:[%s1 + $0x8] sm:$0xff]
  %v26 = vld [vmem:[%s1 + $0x10] sm:$0x33]
  %v27 = vld [vmem:[%s2] sm:$0x3]
  %v29 = vperm.slane %v27, 0
  %v30 = vperm.slane %v27, 1
  %v36 = vunpack.c.l.b16 %v24
  %v37 = vunpack.c.h.b16 %v24
  %v38 = vunpack.c.l.b16 %v25
  %v39 = vunpack.c.h.b16 %v25
  %v40 = vunpack.c.l.b16 %v26
  %v41 = vunpack.c.h.b16 %v26
  %v42 = vpack.c.b16 %v38, %v36
  %v43 = vpack.c.b16 %v39, %v37
  %v44 = vpack.c.b16 %v40, %v40
  %v45 = vpack.c.b16 %v41, %v41
  %vm48 = vcmask 162816
  %v50 = vsel %vm48, %v23, 0
  %vm52 = vcmask 1041408
  %v54 = vsel %vm52, %v44, 0
  %v57 = vsel %vm52, %v45, 0
  %59 = vmatpush.bf16.msra.mxu0 0
  %60 = vmatpush.bf16.msra.mxu0 0
  %61 = vmatpush.bf16.msra.mxu0 0
  %62 = vmatpush.bf16.msra.mxu0 0
  %63 = vmatpush.bf16.msra.mxu0 0
  %64 = vmatpush.bf16.msra.mxu0 0
  %65 = vmatpush.bf16.msra.mxu0 %v54
  %66 = vmatpush.bf16.msra.mxu0 %v42
  %67 = vmatmul.bf16.gmra.mxu0 %v50
  %v68 = vpop.f32.mrf.mxu0
  %v69 = vadd.f32 %v29, %v68
  %v70 = vpop.f32.mrf.mxu0
  %v71 = vadd.f32 %v29, %v70
  %72 = vdwg.mxu0
  %73 = vmatpush.bf16.msra.mxu0 0
  %74 = vmatpush.bf16.msra.mxu0 0
  %75 = vmatpush.bf16.msra.mxu0 0
  %76 = vmatpush.bf16.msra.mxu0 0
  %77 = vmatpush.bf16.msra.mxu0 0
  %78 = vmatpush.bf16.msra.mxu0 0
  %79 = vmatpush.bf16.msra.mxu0 %v57
  %80 = vmatpush.bf16.msra.mxu0 %v43
  %81 = vmatmul.bf16.gmra.mxu0 %v50
  %v82 = vpop.f32.mrf.mxu0
  %v83 = vadd.f32 %v30, %v82
  %v84 = vpop.f32.mrf.mxu0
  %v85 = vadd.f32 %v30, %v84
  %86 = vdwg.mxu0
  %v87 = vmax.f32 %v69, 0.0
  %v88 = vmax.f32 %v83, 0.0
  %v89 = vmax.f32 %v71, 0.0
  %v90 = vmax.f32 %v85, 0.0
  %v91 = vpack.c.bf16 %v89, %v87
  %v92 = vpack.c.bf16 %v90, %v88
  %v93 = vld [vmem:[%s3] sm:$0xf]
  %v94 = vld [vmem:[%s3 + $0x4] sm:$0xf]
  %v95 = vld [vmem:[%s3 + $0x8] sm:$0xf]
  %v96 = vld [vmem:[%s3 + $0xc] sm:$0xf]
  %v97 = vld [vmem:[%s3 + $0x10] sm:$0xf]
  %v98 = vld [vmem:[%s3 + $0x14] sm:$0xf]
  %v99 = vld [vmem:[%s3 + $0x18] sm:$0xf]
  %v100 = vld [vmem:[%s3 + $0x1c] sm:$0xf]
  %v101 = vld [vmem:[%s3 + $0x20] sm:$0xf]
  %v102 = vld [vmem:[%s3 + $0x24] sm:$0xf]
  %v103 = vld [vmem:[%s3 + $0x28] sm:$0xf]
  %v104 = vld [vmem:[%s3 + $0x2c] sm:$0xf]
  %v105 = vld [vmem:[%s3 + $0x30] sm:$0xf]
  %v106 = vld [vmem:[%s3 + $0x34] sm:$0xf]
  %v107 = vld [vmem:[%s3 + $0x38] sm:$0xf]
  %v108 = vld [vmem:[%s3 + $0x3c] sm:$0xf]
  %v109 = vld [vmem:[%s3 + $0x40] sm:$0xf]
  %v110 = vld [vmem:[%s3 + $0x44] sm:$0xf]
  %v111 = vld [vmem:[%s3 + $0x48] sm:$0xf]
  %v112 = vld [vmem:[%s3 + $0x4c] sm:$0xf]
  %v113 = vld [vmem:[%s3 + $0x50] sm:$0xf]
  %v114 = vld [vmem:[%s3 + $0x54] sm:$0xf]
  %v115 = vld [vmem:[%s3 + $0x58] sm:$0xf]
  %v116 = vld [vmem:[%s3 + $0x5c] sm:$0xf]
  %v117 = vld [vmem:[%s3 + $0x60] sm:$0xf]
  %v118 = vld [vmem:[%s3 + $0x64] sm:$0xf]
  %v119 = vld [vmem:[%s3 + $0x68] sm:$0xf]
  %v120 = vld [vmem:[%s3 + $0x6c] sm:$0xf]
  %v121 = vld [vmem:[%s3 + $0x70] sm:$0xf]
  %v122 = vld [vmem:[%s3 + $0x74] sm:$0xf]
  %v123 = vld [vmem:[%s3 + $0x78] sm:$0xf]
  %v124 = vld [vmem:[%s3 + $0x7c] sm:$0xf]
  %v125 = vld [vmem:[%s4] sm:$0x1]
  %v127 = vperm.slane %v125, 0
  %v161 = vunpack.c.l.b16 %v93
  %v162 = vunpack.c.l.b16 %v94
  %v163 = vunpack.c.l.b16 %v95
  %v164 = vunpack.c.l.b16 %v96
  %v165 = vunpack.c.l.b16 %v97
  %v166 = vunpack.c.l.b16 %v98
  %v167 = vunpack.c.l.b16 %v99
  %v168 = vunpack.c.l.b16 %v100
  %v169 = vunpack.c.l.b16 %v101
  %v170 = vunpack.c.l.b16 %v102
  %v171 = vunpack.c.l.b16 %v103
  %v172 = vunpack.c.l.b16 %v104
  %v173 = vunpack.c.l.b16 %v105
  %v174 = vunpack.c.l.b16 %v106
  %v175 = vunpack.c.l.b16 %v107
  %v176 = vunpack.c.l.b16 %v108
  %v177 = vunpack.c.l.b16 %v109
  %v178 = vunpack.c.l.b16 %v110
  %v179 = vunpack.c.l.b16 %v111
  %v180 = vunpack.c.l.b16 %v112
  %v181 = vunpack.c.l.b16 %v113
  %v182 = vunpack.c.l.b16 %v114
  %v183 = vunpack.c.l.b16 %v115
  %v184 = vunpack.c.l.b16 %v116
  %v185 = vunpack.c.l.b16 %v117
  %v186 = vunpack.c.l.b16 %v118
  %v187 = vunpack.c.l.b16 %v119
  %v188 = vunpack.c.l.b16 %v120
  %v189 = vunpack.c.l.b16 %v121
  %v190 = vunpack.c.l.b16 %v122
  %v191 = vunpack.c.l.b16 %v123
  %v192 = vunpack.c.l.b16 %v124
  %v193 = vpack.c.b16 %v162, %v161
  %v194 = vpack.c.b16 %v164, %v163
  %v195 = vpack.c.b16 %v166, %v165
  %v196 = vpack.c.b16 %v168, %v167
  %v197 = vpack.c.b16 %v170, %v169
  %v198 = vpack.c.b16 %v172, %v171
  %v199 = vpack.c.b16 %v174, %v173
  %v200 = vpack.c.b16 %v176, %v175
  %v201 = vpack.c.b16 %v178, %v177
  %v202 = vpack.c.b16 %v180, %v179
  %v203 = vpack.c.b16 %v182, %v181
  %v204 = vpack.c.b16 %v184, %v183
  %v205 = vpack.c.b16 %v186, %v185
  %v206 = vpack.c.b16 %v188, %v187
  %v207 = vpack.c.b16 %v190, %v189
  %v208 = vpack.c.b16 %v192, %v191
  %225 = vmatpush.bf16.msra.mxu0 %v200
  %226 = vmatpush.bf16.msra.mxu0 %v199
  %227 = vmatpush.bf16.msra.mxu0 %v198
  %228 = vmatpush.bf16.msra.mxu0 %v197
  %229 = vmatpush.bf16.msra.mxu0 %v196
  %230 = vmatpush.bf16.msra.mxu0 %v195
  %231 = vmatpush.bf16.msra.mxu0 %v194
  %232 = vmatpush.bf16.msra.mxu0 %v193
  %233 = vmatmul.bf16.gmra.mxu0 %v91
  %v234 = vpop.f32.mrf.mxu0
  %v235 = vadd.f32 %v127, %v234
  %v236 = vpop.f32.mrf.mxu0
  %v237 = vadd.f32 %v127, %v236
  %238 = vdwg.mxu0
  %239 = vmatpush.bf16.msra.mxu0 %v208
  %240 = vmatpush.bf16.msra.mxu0 %v207
  %241 = vmatpush.bf16.msra.mxu0 %v206
  %242 = vmatpush.bf16.msra.mxu0 %v205
  %243 = vmatpush.bf16.msra.mxu0 %v204
  %244 = vmatpush.bf16.msra.mxu0 %v203
  %245 = vmatpush.bf16.msra.mxu0 %v202
  %246 = vmatpush.bf16.msra.mxu0 %v201
  %247 = vmatmul.bf16.gmra.mxu0 %v92
  %v248 = vpop.f32.mrf.mxu0
  %v249 = vadd.f32 %v235, %v248
  %v250 = vpop.f32.mrf.mxu0
  %v251 = vadd.f32 %v237, %v250
  %252 = vdwg.mxu0
  %vm253 = vcmask 80896
  %254 = vst.msk [vmem:[%s5] sm:$0xff] %vm253, %v249
  %255 = vst.msk [vmem:[%s5 + $0x8] sm:$0xff] %vm253, %v251
  // Predicated region
  $region22: #{mlp_forward.1} parent=0 // pred_check
    _
  $region23: #{mlp_forward.1} parent=0 // pred_check_branch
    %257 = sbr.rel (0) target = $region25
  $region24: #{mlp_forward.1} parent=0 // pred_region
    _
  $region25: #{mlp_forward.1} parent=0 // pred_fallthru
    _
  // Predicated region
  $region26: #{mlp_forward.1} parent=0 // pred_check
    _
  $region27: #{mlp_forward.1} parent=0 // pred_check_branch
    %259 = sbr.rel (0) target = $region29
  $region28: #{mlp_forward.1} parent=0 // pred_region
    _
  $region29: #{mlp_forward.1} parent=0 // pred_fallthru
    _

</llo_original>
